<compile_context>
chip_gen: v5e
topology: v5e:2x2
jax: 0.10.0
libtpu: 0.0.40
codegen_flags: <defaults>
</compile_context>

<pallas_src>
import functools

import jax
import jax.numpy as jnp
from jax.experimental import pallas as pl
from jax.experimental.pallas import tpu as pltpu


def _round_up(n, m):
    return ((n + m - 1) // m) * m


def _pad2(a, rows, cols):
    r, c = a.shape
    return jnp.pad(a, ((0, rows - r), (0, cols - c)))


# ----------------------------------------------------------------------------
# Kernel: one batch tile through l1 -> LReLU -> l2 -> LReLU -> l3.
# Dropout is identity (eval mode); BatchNorms are unused in forward.
# ----------------------------------------------------------------------------
def _doodle_kernel(x_ref, w1_ref, b1_ref, w2_ref, b2_ref, w3_ref, b3_ref, out_ref):
    slope = jnp.float32(0.2)

    def leaky(h):
        return jnp.where(h > 0, h, slope * h)

    # Cast the activation tile to bf16 in-kernel (saves an HBM pad/cast pass).
    x = x_ref[...].astype(jnp.bfloat16)                       # [bt, Dp]

    # l1 + LeakyReLU
    h = jnp.dot(x, w1_ref[...], preferred_element_type=jnp.float32) + b1_ref[...]
    h = leaky(h)
    # TODO(synk): training-mode nn.Dropout(p=0.2) would need pltpu.prng_random_bits;
    # eval-mode dropout is the identity, which is what is implemented here.

    # l2 (this pre-activation is `feat` when return_feats=True) + LeakyReLU
    h = jnp.dot(h.astype(jnp.bfloat16), w2_ref[...],
                preferred_element_type=jnp.float32) + b2_ref[...]
    h = leaky(h)

    # l3 -> logits (f32, lane-dense padded to Op)
    out_ref[...] = (jnp.dot(h.astype(jnp.bfloat16), w3_ref[...],
                            preferred_element_type=jnp.float32) + b3_ref[...])


# ----------------------------------------------------------------------------
# One-time parameter packing (pad to lane-dense tiles, cast weights to bf16).
# Call once; reuse the result across every forward call.
# ----------------------------------------------------------------------------
def pack_params(params):
    D, Hd = params["w1"].shape
    Od = params["w3"].shape[1]
    Dp, Hp, Op = _round_up(D, 128), _round_up(Hd, 128), _round_up(Od, 128)
    return dict(
        w1=_pad2(params["w1"], Dp, Hp).astype(jnp.bfloat16),
        b1=_pad2(params["b1"], 1, Hp).astype(jnp.float32),
        w2=_pad2(params["w2"], Hp, Hp).astype(jnp.bfloat16),
        b2=_pad2(params["b2"], 1, Hp).astype(jnp.float32),
        w3=_pad2(params["w3"], Hp, Op).astype(jnp.bfloat16),
        b3=_pad2(params["b3"], 1, Op).astype(jnp.float32),
    )


def _pick_batch_tile(B, Dp, Op, requested, sub):
    """Largest batch tile that fits the pipelined VMEM budget (f32 x + f32 out,
    both double-buffered), with a >=2-step cap for v7x's two TensorCores."""
    row_bytes = 2 * Dp * 4 + 2 * Op * 4           # per batch row, double-buffered
    budget = 24 * 1024 * 1024                     # ~8 MiB headroom under 32 MiB limit
    cap = max(sub, (budget // row_bytes) // sub * sub)
    bt = max(sub, min(_round_up(requested, sub), cap))
    if B >= 2 * sub:
        # At least two grid steps when there is enough work (v7x megacore).
        bt = min(bt, _round_up(pl.cdiv(B, 2), sub))
    else:
        # Tiny batch: single exact block (block dim == full array dim is legal).
        bt = B
    return bt


@functools.partial(jax.jit, static_argnames=("out_dim", "block_b"))
def doodle_mlp_forward(x, packed, *, out_dim, block_b=2048):
    """x: [B, C, H, W] (or already [B, D]); packed: output of pack_params()."""
    B = x.shape[0]
    x2d = x.reshape(B, -1)                         # torch .flatten(1); free
    if x2d.dtype != jnp.bfloat16:
        x2d = x2d.astype(jnp.float32)              # no-op for f32 input
    D = x2d.shape[1]
    Dp, Hp = packed["w1"].shape
    Op = packed["w3"].shape[1]
    if D < Dp:                                     # only when in_dim not lane-aligned
        x2d = jnp.pad(x2d, ((0, 0), (0, Dp - D)))

    sub = 16 if x2d.dtype == jnp.bfloat16 else 8
    bt = _pick_batch_tile(B, Dp, Op, block_b, sub)
    grid = (pl.cdiv(B, bt),)

    out_p = pl.pallas_call(
        _doodle_kernel,
        out_shape=jax.ShapeDtypeStruct((B, Op), jnp.float32),
        grid_spec=pltpu.PrefetchScalarGridSpec(
            num_scalar_prefetch=0,
            grid=grid,
            in_specs=[
                pl.BlockSpec((bt, Dp), lambda i: (i, 0)),   # x tile (bf16 cast in-kernel)
                pl.BlockSpec((Dp, Hp), lambda i: (0, 0)),   # w1 (grid-invariant)
                pl.BlockSpec((1, Hp), lambda i: (0, 0)),    # b1
                pl.BlockSpec((Hp, Hp), lambda i: (0, 0)),   # w2
                pl.BlockSpec((1, Hp), lambda i: (0, 0)),    # b2
                pl.BlockSpec((Hp, Op), lambda i: (0, 0)),   # w3
                pl.BlockSpec((1, Op), lambda i: (0, 0)),    # b3
            ],
            out_specs=pl.BlockSpec((bt, Op), lambda i: (i, 0)),
        ),
        compiler_params=pltpu.CompilerParams(
            dimension_semantics=("parallel",),
            vmem_limit_bytes=32 * 1024 * 1024,
        ),
    )(x2d, packed["w1"], packed["b1"], packed["w2"], packed["b2"],
      packed["w3"], packed["b3"])

    # Drop lane padding on the logits; rows are exact (out_shape is (B, Op)).
    return out_p[:, :out_dim]


# ----------------------------------------------------------------------------
# Deterministic synthetic parameters matching torch Linear defaults.
# ----------------------------------------------------------------------------
def init_params(key, in_dim, hid_dim, out_dim):
    ks = jax.random.split(key, 6)

    def linear(kw, kb, fan_in, fan_out):
        bound = 1.0 / (fan_in ** 0.5)
        # stored already transposed: (in, out), so kernel does x @ W
        w = jax.random.uniform(kw, (fan_in, fan_out), jnp.float32, -bound, bound)
        b = jax.random.uniform(kb, (1, fan_out), jnp.float32, -bound, bound)
        return w, b

    w1, b1 = linear(ks[0], ks[1], in_dim, hid_dim)
    w2, b2 = linear(ks[2], ks[3], hid_dim, hid_dim)
    w3, b3 = linear(ks[4], ks[5], hid_dim, out_dim)
    return dict(w1=w1, b1=b1, w2=w2, b2=b2, w3=w3, b3=b3)


def _reference_forward(x, params):
    """Pure-JAX reference mirroring the PyTorch forward (eval-mode dropout).

    Matmul operands cast to bf16 with f32 accumulation, matching the kernel's
    mixed-precision policy so the comparison is tight.
    """
    slope = 0.2
    h = x.reshape(x.shape[0], -1).astype(jnp.float32)

    def mm(a, w, b):
        return jnp.dot(a.astype(jnp.bfloat16), w.astype(jnp.bfloat16),
                       preferred_element_type=jnp.float32) + b

    def lrelu(v):
        return jnp.where(v > 0, v, slope * v)

    h = lrelu(mm(h, params["w1"], params["b1"]))
    h = lrelu(mm(h, params["w2"], params["b2"]))
    return mm(h, params["w3"], params["b3"])


if __name__ == "__main__":
    key = jax.random.PRNGKey(0)
    k_x, k_p = jax.random.split(key)

    B, C, H, W = 2, 4, 16, 16                 # in_dim = C*H*W = 1024
    in_dim, hid_dim, out_dim = C * H * W, 32, 16

    x = jax.random.normal(k_x, (B, C, H, W), jnp.float32)
    params = init_params(k_p, in_dim, hid_dim, out_dim)

    packed = pack_params(params)              # one-time pad/cast; reuse every call

    out = doodle_mlp_forward(x, packed, out_dim=out_dim)
    out = jax.block_until_ready(out)

    ref = _reference_forward(x, params)
    assert out.shape == (B, out_dim)
    assert jnp.allclose(out, ref, atol=2e-3, rtol=2e-3), "mismatch vs. JAX reference"

    print("KERNEL_OK")
</pallas_src>

<mosaic_0001>
module attributes {stable_mosaic.version = 11 : i64} {
  func.func @_doodle_kernel(%arg0: i32, %arg1: memref<2x1024xf32, #tpu.memory_space<vmem>>, %arg2: memref<1024x128xbf16, #tpu.memory_space<vmem>>, %arg3: memref<1x128xf32, #tpu.memory_space<vmem>>, %arg4: memref<128x128xbf16, #tpu.memory_space<vmem>>, %arg5: memref<1x128xf32, #tpu.memory_space<vmem>>, %arg6: memref<128x128xbf16, #tpu.memory_space<vmem>>, %arg7: memref<1x128xf32, #tpu.memory_space<vmem>>, %arg8: memref<2x128xf32, #tpu.memory_space<vmem>>) attributes {dimension_semantics = [#tpu.dimension_semantics<parallel>], iteration_bounds = array<i64: 1>, scalar_prefetch = 0 : i64, scratch_operands = 0 : i64, tpu.core_type = #tpu.core_type<tc>, window_params = [{transform_indices = @transform_0, window_bounds = array<i64: 2, 1024>}, {pipeline_mode = #tpu.pipeline_mode<synchronous>, transform_indices = @transform_1, window_bounds = array<i64: 1024, 128>}, {pipeline_mode = #tpu.pipeline_mode<synchronous>, transform_indices = @transform_2, window_bounds = array<i64: 1, 128>}, {pipeline_mode = #tpu.pipeline_mode<synchronous>, transform_indices = @transform_3, window_bounds = array<i64: 128, 128>}, {pipeline_mode = #tpu.pipeline_mode<synchronous>, transform_indices = @transform_4, window_bounds = array<i64: 1, 128>}, {pipeline_mode = #tpu.pipeline_mode<synchronous>, transform_indices = @transform_5, window_bounds = array<i64: 128, 128>}, {pipeline_mode = #tpu.pipeline_mode<synchronous>, transform_indices = @transform_6, window_bounds = array<i64: 1, 128>}, {transform_indices = @transform_7, window_bounds = array<i64: 2, 128>}]} {
    %c0 = arith.constant 0 : index
    %c0_0 = arith.constant 0 : index
    %0 = vector.load %arg1[%c0, %c0_0] : memref<2x1024xf32, #tpu.memory_space<vmem>>, vector<2x1024xf32>
    %1 = arith.truncf %0 : vector<2x1024xf32> to vector<2x1024xbf16>
    %c0_1 = arith.constant 0 : index
    %c0_2 = arith.constant 0 : index
    %2 = vector.load %arg2[%c0_1, %c0_2] : memref<1024x128xbf16, #tpu.memory_space<vmem>>, vector<1024x128xbf16>
    %cst = arith.constant dense<0.000000e+00> : vector<2x128xf32>
    %3 = tpu.matmul %1, %2, %cst {dimension_numbers = #tpu.dot_dimension_numbers<[1], [0], [0], [1], [0, 0, 1, 1], [], []>} : vector<2x1024xbf16>, vector<1024x128xbf16>, vector<2x128xf32> -> vector<2x128xf32>
    %c0_3 = arith.constant 0 : index
    %c0_4 = arith.constant 0 : index
    %4 = vector.load %arg3[%c0_3, %c0_4] : memref<1x128xf32, #tpu.memory_space<vmem>>, vector<1x128xf32>
    %5 = vector.broadcast %4 : vector<1x128xf32> to vector<2x128xf32>
    %6 = arith.addf %3, %5 : vector<2x128xf32>
    %cst_5 = arith.constant 0.000000e+00 : f32
    %7 = vector.broadcast %cst_5 : f32 to vector<2x128xf32>
    %8 = arith.cmpf ogt, %6, %7 : vector<2x128xf32>
    %cst_6 = arith.constant 2.000000e-01 : f32
    %9 = vector.broadcast %cst_6 : f32 to vector<2x128xf32>
    %10 = arith.mulf %9, %6 : vector<2x128xf32>
    %11 = arith.select %8, %6, %10 : vector<2x128xi1>, vector<2x128xf32>
    %12 = arith.truncf %11 : vector<2x128xf32> to vector<2x128xbf16>
    %c0_7 = arith.constant 0 : index
    %c0_8 = arith.constant 0 : index
    %13 = vector.load %arg4[%c0_7, %c0_8] : memref<128x128xbf16, #tpu.memory_space<vmem>>, vector<128x128xbf16>
    %cst_9 = arith.constant dense<0.000000e+00> : vector<2x128xf32>
    %14 = tpu.matmul %12, %13, %cst_9 {dimension_numbers = #tpu.dot_dimension_numbers<[1], [0], [0], [1], [0, 0, 1, 1], [], []>} : vector<2x128xbf16>, vector<128x128xbf16>, vector<2x128xf32> -> vector<2x128xf32>
    %c0_10 = arith.constant 0 : index
    %c0_11 = arith.constant 0 : index
    %15 = vector.load %arg5[%c0_10, %c0_11] : memref<1x128xf32, #tpu.memory_space<vmem>>, vector<1x128xf32>
    %16 = vector.broadcast %15 : vector<1x128xf32> to vector<2x128xf32>
    %17 = arith.addf %14, %16 : vector<2x128xf32>
    %cst_12 = arith.constant 0.000000e+00 : f32
    %18 = vector.broadcast %cst_12 : f32 to vector<2x128xf32>
    %19 = arith.cmpf ogt, %17, %18 : vector<2x128xf32>
    %cst_13 = arith.constant 2.000000e-01 : f32
    %20 = vector.broadcast %cst_13 : f32 to vector<2x128xf32>
    %21 = arith.mulf %20, %17 : vector<2x128xf32>
    %22 = arith.select %19, %17, %21 : vector<2x128xi1>, vector<2x128xf32>
    %23 = arith.truncf %22 : vector<2x128xf32> to vector<2x128xbf16>
    %c0_14 = arith.constant 0 : index
    %c0_15 = arith.constant 0 : index
    %24 = vector.load %arg6[%c0_14, %c0_15] : memref<128x128xbf16, #tpu.memory_space<vmem>>, vector<128x128xbf16>
    %cst_16 = arith.constant dense<0.000000e+00> : vector<2x128xf32>
    %25 = tpu.matmul %23, %24, %cst_16 {dimension_numbers = #tpu.dot_dimension_numbers<[1], [0], [0], [1], [0, 0, 1, 1], [], []>} : vector<2x128xbf16>, vector<128x128xbf16>, vector<2x128xf32> -> vector<2x128xf32>
    %c0_17 = arith.constant 0 : index
    %c0_18 = arith.constant 0 : index
    %26 = vector.load %arg7[%c0_17, %c0_18] : memref<1x128xf32, #tpu.memory_space<vmem>>, vector<1x128xf32>
    %27 = vector.broadcast %26 : vector<1x128xf32> to vector<2x128xf32>
    %28 = arith.addf %25, %27 : vector<2x128xf32>
    %c0_19 = arith.constant 0 : index
    %c0_20 = arith.constant 0 : index
    %29 = vector.load %arg8[%c0_19, %c0_20] : memref<2x128xf32, #tpu.memory_space<vmem>>, vector<2x128xf32>
    tpu.vector_store %arg8[%c0_19, %c0_20], %28 {strides = array<i32>} : memref<2x128xf32, #tpu.memory_space<vmem>>, vector<2x128xf32>,
    return
  }
  func.func @transform_0(%arg0: i32) -> (i32, i32) {
    %c0_i32 = arith.constant 0 : i32
    %c0_i32_0 = arith.constant 0 : i32
    return %arg0, %c0_i32 : i32, i32
  }
  func.func @transform_1(%arg0: i32) -> (i32, i32) {
    %c0_i32 = arith.constant 0 : i32
    %c0_i32_0 = arith.constant 0 : i32
    %c0_i32_1 = arith.constant 0 : i32
    return %c0_i32, %c0_i32_0 : i32, i32
  }
  func.func @transform_2(%arg0: i32) -> (i32, i32) {
    %c0_i32 = arith.constant 0 : i32
    %c0_i32_0 = arith.constant 0 : i32
    %c0_i32_1 = arith.constant 0 : i32
    return %c0_i32, %c0_i32_0 : i32, i32
  }
  func.func @transform_3(%arg0: i32) -> (i32, i32) {
    %c0_i32 = arith.constant 0 : i32
    %c0_i32_0 = arith.constant 0 : i32
    %c0_i32_1 = arith.constant 0 : i32
    return %c0_i32, %c0_i32_0 : i32, i32
  }
  func.func @transform_4(%arg0: i32) -> (i32, i32) {
    %c0_i32 = arith.constant 0 : i32
    %c0_i32_0 = arith.constant 0 : i32
    %c0_i32_1 = arith.constant 0 : i32
    return %c0_i32, %c0_i32_0 : i32, i32
  }
  func.func @transform_5(%arg0: i32) -> (i32, i32) {
    %c0_i32 = arith.constant 0 : i32
    %c0_i32_0 = arith.constant 0 : i32
    %c0_i32_1 = arith.constant 0 : i32
    return %c0_i32, %c0_i32_0 : i32, i32
  }
  func.func @transform_6(%arg0: i32) -> (i32, i32) {
    %c0_i32 = arith.constant 0 : i32
    %c0_i32_0 = arith.constant 0 : i32
    %c0_i32_1 = arith.constant 0 : i32
    return %c0_i32, %c0_i32_0 : i32, i32
  }
  func.func @transform_7(%arg0: i32) -> (i32, i32) {
    %c0_i32 = arith.constant 0 : i32
    %c0_i32_0 = arith.constant 0 : i32
    return %arg0, %c0_i32 : i32, i32
  }
}

</mosaic_0001>

<llo_original>
// kernel: doodle_mlp_forward.1
$region0: #{doodle_mlp_forward.1}
  #allocation0 [shape = 'u32[]', space=smem, size = 0x4, offset = 0x4, fixed_abs, tag = 'smem constant byte address 0x4 - core index']
  #allocation1 [shape = 'u32[72,128]{1,0:T(1,128)}', space=vmem, size = 0x9000, scoped, tag = 'internal scratch']
  %s0 = inlined_call_operand.vmem [shape: f32[2,1024], index: 0, kind: input, shape index: {}]
  %s1 = inlined_call_operand.hbm [shape: bf16[1024,128], index: 1, kind: input, shape index: {}]
  %s2 = inlined_call_operand.vmem [shape: f32[1,128], index: 2, kind: input, shape index: {}]
  %s3 = inlined_call_operand.vmem [shape: bf16[128,128], index: 3, kind: input, shape index: {}]
  %s4 = inlined_call_operand.vmem [shape: f32[1,128], index: 4, kind: input, shape index: {}]
  %s5 = inlined_call_operand.vmem [shape: bf16[128,128], index: 5, kind: input, shape index: {}]
  %s6 = inlined_call_operand.vmem [shape: f32[1,128], index: 6, kind: input, shape index: {}]
  %s7 = inlined_call_operand.hbm [shape: f32[2,128], index: 7, kind: output, shape index: {}]
  %s8 = sld [smem:[#allocation0]]
  $region42: #{doodle_mlp_forward.1} parent=0
    _
  %s10 = ssub.s32 1, %s8
  %s11 = scalar_select 0, %s10, %s8
  $region1: #{doodle_mlp_forward.1} parent=0
    #allocation2 [shape = 'u8[262144]{0}', space=vmem, size = 0x40000, scoped, tag = 'input window, operand 1, single buffered']
    #allocation3 [shape = 's32[1]{0}', space=sflag, size = 0x4, scoped, tag = 'scoped memory for doodle_mlp_forward.1']
    #allocation4 [shape = 's32[1]{0}', space=sflag, size = 0x4, scoped, tag = 'scoped memory for doodle_mlp_forward.1']
    #allocation5 [shape = 'u8[1024]{0}', space=vmem, size = 0x400, scoped, tag = 'output window, operand 0, single buffered']
    %12 = vsyncpa [#allocation3], 0
    %13 = vsyncpa [#allocation4], 0
    // Predicated region
    $region2: #{doodle_mlp_forward.1} parent=1 // pred_check
      _
    $region3: #{doodle_mlp_forward.1} parent=1 // pred_check_branch
      %15 = sbr.rel (0) target = $region5
    $region4: #{doodle_mlp_forward.1} parent=1 // pred_region
      _
    $region5: #{doodle_mlp_forward.1} parent=1 // pred_fallthru
      _
    // Predicated region
    $region6: #{doodle_mlp_forward.1} parent=1 // pred_check
      _
    $region7: #{doodle_mlp_forward.1} parent=1 // pred_check_branch
      %17 = sbr.rel (0) target = $region9
    $region8: #{doodle_mlp_forward.1} parent=1 // pred_region
      %19 = vsyncadd [#allocation3], 0
      %s20 = sshll.u32 %s1, 4
      %s21 = int_to_ptr.hbm [resolvable:$true] %s20
      %s22 = sshll.u32 [#allocation2], 4
      %s23 = int_to_ptr.vmem [resolvable:$true] %s22
      %28 = dma.hbm_to_vmem [thread:$0]  %s21, 8192, %s23, [#allocation3], 64, 64, 4
    $region9: #{doodle_mlp_forward.1} parent=1 // pred_fallthru
      _
    // Predicated region
    $region10: #{doodle_mlp_forward.1} parent=1 // pred_check
      _
    $region11: #{doodle_mlp_forward.1} parent=1 // pred_check_branch
      %30 = sbr.rel (0) target = $region13
    $region12: #{doodle_mlp_forward.1} parent=1 // pred_region
      _
    $region13: #{doodle_mlp_forward.1} parent=1 // pred_fallthru
      _
    // Predicated region
    $region14: #{doodle_mlp_forward.1} parent=1 // pred_check
      _
    $region15: #{doodle_mlp_forward.1} parent=1 // pred_check_branch
      %32 = sbr.rel (0) target = $region17
    $region16: #{doodle_mlp_forward.1} parent=1 // pred_region
      _
    $region17: #{doodle_mlp_forward.1} parent=1 // pred_fallthru
      _
    // Predicated region
    $region18: #{doodle_mlp_forward.1} parent=1 // pred_check
      _
    $region19: #{doodle_mlp_forward.1} parent=1 // pred_check_branch
      %34 = sbr.rel (0) target = $region21
    $region20: #{doodle_mlp_forward.1} parent=1 // pred_region
      _
    $region21: #{doodle_mlp_forward.1} parent=1 // pred_fallthru
      _
    // Predicated region
    $region22: #{doodle_mlp_forward.1} parent=1 // pred_check
      _
    $region23: #{doodle_mlp_forward.1} parent=1 // pred_check_branch
      %36 = sbr.rel (0) target = $region25
    $region24: #{doodle_mlp_forward.1} parent=1 // pred_region
      _
    $region25: #{doodle_mlp_forward.1} parent=1 // pred_fallthru
      _
    // Predicated region
    $region26: #{doodle_mlp_forward.1} parent=1 // pred_check
      _
    $region27: #{doodle_mlp_forward.1} parent=1 // pred_check_branch
      %38 = sbr.rel (0) target = $region29
    $region28: #{doodle_mlp_forward.1} parent=1 // pred_region
      _
    $region29: #{doodle_mlp_forward.1} parent=1 // pred_fallthru
      _
    // Predicated region
    $region30: #{doodle_mlp_forward.1} parent=1 // pred_check
      _
    $region31: #{doodle_mlp_forward.1} parent=1 // pred_check_branch
      %40 = sbr.rel (0) target = $region33
    $region32: #{doodle_mlp_forward.1} parent=1 // pred_region
      %42 = dma.done [#allocation3], 8192
    $region33: #{doodle_mlp_forward.1} parent=1 // pred_fallthru
      _
    %v43 = vld [vmem:[%s0] sm:$0xff]
    %v44 = vld [vmem:[%s0 + $0x8] sm:$0xff]
    %47 = vst [vmem:[#allocation1] ss:$4 sm:$0xff] %v43
    %s48 = scalar_lea.vmem [#allocation1], 32
    %49 = vst [vmem:[%s48] ss:$4 sm:$0xff] %v44
    %v50 = vld.sshfl [vmem:[#allocation1] sm:$0xff pattern:$0x73625140]
    %v51 = vld.sshfl [vmem:[#allocation1 + $0x8] sm:$0xff pattern:$0x73625140]
    %v52 = vld.sshfl [vmem:[#allocation1 + $0x10] sm:$0xff pattern:$0x73625140]
    %v53 = vld.sshfl [vmem:[#allocation1 + $0x18] sm:$0xff pattern:$0x73625140]
    %v54 = vld.sshfl [vmem:[#allocation1 + $0x20] sm:$0xff pattern:$0x73625140]
    %v55 = vld.sshfl [vmem:[#allocation1 + $0x28] sm:$0xff pattern:$0x73625140]
    %v56 = vld.sshfl [vmem:[#allocation1 + $0x30] sm:$0xff pattern:$0x73625140]
    %v57 = vld.sshfl [vmem:[#allocation1 + $0x38] sm:$0xff pattern:$0x73625140]
    %v66 = vpack.c.bf16 %v50, %v50
    %v67 = vpack.c.bf16 %v51, %v51
    %v68 = vpack.c.bf16 %v52, %v52
    %v69 = vpack.c.bf16 %v53, %v53
    %v70 = vpack.c.bf16 %v54, %v54
    %v71 = vpack.c.bf16 %v55, %v55
    %v72 = vpack.c.bf16 %v56, %v56
    %v73 = vpack.c.bf16 %v57, %v57
    %v74 = vld [vmem:[#allocation2] sm:$0xf]
    %v75 = vld [vmem:[#allocation2 + $0x4] sm:$0xf]
    %v76 = vld [vmem:[#allocation2 + $0x8] sm:$0xf]
    %v77 = vld [vmem:[#allocation2 + $0xc] sm:$0xf]
    %v78 = vld [vmem:[#allocation2 + $0x10] sm:$0xf]
    %v79 = vld [vmem:[#allocation2 + $0x14] sm:$0xf]
    %v80 = vld [vmem:[#allocation2 + $0x18] sm:$0xf]
    %v81 = vld [vmem:[#allocation2 + $0x1c] sm:$0xf]
    %v82 = vld [vmem:[#allocation2 + $0x20] sm:$0xf]
    %v83 = vld [vmem:[#allocation2 + $0x24] sm:$0xf]
    %v84 = vld [vmem:[#allocation2 + $0x28] sm:$0xf]
    %v85 = vld [vmem:[#allocation2 + $0x2c] sm:$0xf]
    %v86 = vld [vmem:[#allocation2 + $0x30] sm:$0xf]
    %v87 = vld [vmem:[#allocation2 + $0x34] sm:$0xf]
    %v88 = vld [vmem:[#allocation2 + $0x38] sm:$0xf]
    %v89 = vld [vmem:[#allocation2 + $0x3c] sm:$0xf]
    %v90 = vld [vmem:[#allocation2 + $0x40] sm:$0xf]
    %v91 = vld [vmem:[#allocation2 + $0x44] sm:$0xf]
    %v92 = vld [vmem:[#allocation2 + $0x48] sm:$0xf]
    %v93 = vld [vmem:[#allocation2 + $0x4c] sm:$0xf]
    %v94 = vld [vmem:[#allocation2 + $0x50] sm:$0xf]
    %v95 = vld [vmem:[#allocation2 + $0x54] sm:$0xf]
    %v96 = vld [vmem:[#allocation2 + $0x58] sm:$0xf]
    %v97 = vld [vmem:[#allocation2 + $0x5c] sm:$0xf]
    %v98 = vld [vmem:[#allocation2 + $0x60] sm:$0xf]
    %v99 = vld [vmem:[#allocation2 + $0x64] sm:$0xf]
    %v100 = vld [vmem:[#allocation2 + $0x68] sm:$0xf]
    %v101 = vld [vmem:[#allocation2 + $0x6c] sm:$0xf]
    %v102 = vld [vmem:[#allocation2 + $0x70] sm:$0xf]
    %v103 = vld [vmem:[#allocation2 + $0x74] sm:$0xf]
    %v104 = vld [vmem:[#allocation2 + $0x78] sm:$0xf]
    %v105 = vld [vmem:[#allocation2 + $0x7c] sm:$0xf]
    %v106 = vld [vmem:[#allocation2 + $0x80] sm:$0xf]
    %v107 = vld [vmem:[#allocation2 + $0x84] sm:$0xf]
    %v108 = vld [vmem:[#allocation2 + $0x88] sm:$0xf]
    %v109 = vld [vmem:[#allocation2 + $0x8c] sm:$0xf]
    %v110 = vld [vmem:[#allocation2 + $0x90] sm:$0xf]
    %v111 = vld [vmem:[#allocation2 + $0x94] sm:$0xf]
    %v112 = vld [vmem:[#allocation2 + $0x98] sm:$0xf]
    %v113 = vld [vmem:[#allocation2 + $0x9c] sm:$0xf]
    %v114 = vld [vmem:[#allocation2 + $0xa0] sm:$0xf]
    %v115 = vld [vmem:[#allocation2 + $0xa4] sm:$0xf]
    %v116 = vld [vmem:[#allocation2 + $0xa8] sm:$0xf]
    %v117 = vld [vmem:[#allocation2 + $0xac] sm:$0xf]
    %v118 = vld [vmem:[#allocation2 + $0xb0] sm:$0xf]
    %v119 = vld [vmem:[#allocation2 + $0xb4] sm:$0xf]
    %v120 = vld [vmem:[#allocation2 + $0xb8] sm:$0xf]
    %v121 = vld [vmem:[#allocation2 + $0xbc] sm:$0xf]
    %v122 = vld [vmem:[#allocation2 + $0xc0] sm:$0xf]
    %v123 = vld [vmem:[#allocation2 + $0xc4] sm:$0xf]
    %v124 = vld [vmem:[#allocation2 + $0xc8] sm:$0xf]
    %v125 = vld [vmem:[#allocation2 + $0xcc] sm:$0xf]
    %v126 = vld [vmem:[#allocation2 + $0xd0] sm:$0xf]
    %v127 = vld [vmem:[#allocation2 + $0xd4] sm:$0xf]
    %v128 = vld [vmem:[#allocation2 + $0xd8] sm:$0xf]
    %v129 = vld [vmem:[#allocation2 + $0xdc] sm:$0xf]
    %v130 = vld [vmem:[#allocation2 + $0xe0] sm:$0xf]
    %v131 = vld [vmem:[#allocation2 + $0xe4] sm:$0xf]
    %v132 = vld [vmem:[#allocation2 + $0xe8] sm:$0xf]
    %v133 = vld [vmem:[#allocation2 + $0xec] sm:$0xf]
    %v134 = vld [vmem:[#allocation2 + $0xf0] sm:$0xf]
    %v135 = vld [vmem:[#allocation2 + $0xf4] sm:$0xf]
    %v136 = vld [vmem:[#allocation2 + $0xf8] sm:$0xf]
    %v137 = vld [vmem:[#allocation2 + $0xfc] sm:$0xf]
    %v138 = vld [vmem:[#allocation2 + $0x100] sm:$0xf]
    %v139 = vld [vmem:[#allocation2 + $0x104] sm:$0xf]
    %v140 = vld [vmem:[#allocation2 + $0x108] sm:$0xf]
    %v141 = vld [vmem:[#allocation2 + $0x10c] sm:$0xf]
    %v142 = vld [vmem:[#allocation2 + $0x110] sm:$0xf]
    %v143 = vld [vmem:[#allocation2 + $0x114] sm:$0xf]
    %v144 = vld [vmem:[#allocation2 + $0x118] sm:$0xf]
    %v145 = vld [vmem:[#allocation2 + $0x11c] sm:$0xf]
    %v146 = vld [vmem:[#allocation2 + $0x120] sm:$0xf]
    %v147 = vld [vmem:[#allocation2 + $0x124] sm:$0xf]
    %v148 = vld [vmem:[#allocation2 + $0x128] sm:$0xf]
    %v149 = vld [vmem:[#allocation2 + $0x12c] sm:$0xf]
    %v150 = vld [vmem:[#allocation2 + $0x130] sm:$0xf]
    %v151 = vld [vmem:[#allocation2 + $0x134] sm:$0xf]
    %v152 = vld [vmem:[#allocation2 + $0x138] sm:$0xf]
    %v153 = vld [vmem:[#allocation2 + $0x13c] sm:$0xf]
    %v154 = vld [vmem:[#allocation2 + $0x140] sm:$0xf]
    %v155 = vld [vmem:[#allocation2 + $0x144] sm:$0xf]
    %v156 = vld [vmem:[#allocation2 + $0x148] sm:$0xf]
    %v157 = vld [vmem:[#allocation2 + $0x14c] sm:$0xf]
    %v158 = vld [vmem:[#allocation2 + $0x150] sm:$0xf]
    %v159 = vld [vmem:[#allocation2 + $0x154] sm:$0xf]
    %v160 = vld [vmem:[#allocation2 + $0x158] sm:$0xf]
    %v161 = vld [vmem:[#allocation2 + $0x15c] sm:$0xf]
    %v162 = vld [vmem:[#allocation2 + $0x160] sm:$0xf]
    %v163 = vld [vmem:[#allocation2 + $0x164] sm:$0xf]
    %v164 = vld [vmem:[#allocation2 + $0x168] sm:$0xf]
    %v165 = vld [vmem:[#allocation2 + $0x16c] sm:$0xf]
    %v166 = vld [vmem:[#allocation2 + $0x170] sm:$0xf]
    %v167 = vld [vmem:[#allocation2 + $0x174] sm:$0xf]
    %v168 = vld [vmem:[#allocation2 + $0x178] sm:$0xf]
    %v169 = vld [vmem:[#allocation2 + $0x17c] sm:$0xf]
    %v170 = vld [vmem:[#allocation2 + $0x180] sm:$0xf]
    %v171 = vld [vmem:[#allocation2 + $0x184] sm:$0xf]
    %v172 = vld [vmem:[#allocation2 + $0x188] sm:$0xf]
    %v173 = vld [vmem:[#allocation2 + $0x18c] sm:$0xf]
    %v174 = vld [vmem:[#allocation2 + $0x190] sm:$0xf]
    %v175 = vld [vmem:[#allocation2 + $0x194] sm:$0xf]
    %v176 = vld [vmem:[#allocation2 + $0x198] sm:$0xf]
    %v177 = vld [vmem:[#allocation2 + $0x19c] sm:$0xf]
    %v178 = vld [vmem:[#allocation2 + $0x1a0] sm:$0xf]
    %v179 = vld [vmem:[#allocation2 + $0x1a4] sm:$0xf]
    %v180 = vld [vmem:[#allocation2 + $0x1a8] sm:$0xf]
    %v181 = vld [vmem:[#allocation2 + $0x1ac] sm:$0xf]
    %v182 = vld [vmem:[#allocation2 + $0x1b0] sm:$0xf]
    %v183 = vld [vmem:[#allocation2 + $0x1b4] sm:$0xf]
    %v184 = vld [vmem:[#allocation2 + $0x1b8] sm:$0xf]
    %v185 = vld [vmem:[#allocation2 + $0x1bc] sm:$0xf]
    %v186 = vld [vmem:[#allocation2 + $0x1c0] sm:$0xf]
    %v187 = vld [vmem:[#allocation2 + $0x1c4] sm:$0xf]
    %v188 = vld [vmem:[#allocation2 + $0x1c8] sm:$0xf]
    %v189 = vld [vmem:[#allocation2 + $0x1cc] sm:$0xf]
    %v190 = vld [vmem:[#allocation2 + $0x1d0] sm:$0xf]
    %v191 = vld [vmem:[#allocation2 + $0x1d4] sm:$0xf]
    %v192 = vld [vmem:[#allocation2 + $0x1d8] sm:$0xf]
    %v193 = vld [vmem:[#allocation2 + $0x1dc] sm:$0xf]
    %v194 = vld [vmem:[#allocation2 + $0x1e0] sm:$0xf]
    %v195 = vld [vmem:[#allocation2 + $0x1e4] sm:$0xf]
    %v196 = vld [vmem:[#allocation2 + $0x1e8] sm:$0xf]
    %v197 = vld [vmem:[#allocation2 + $0x1ec] sm:$0xf]
    %v198 = vld [vmem:[#allocation2 + $0x1f0] sm:$0xf]
    %v199 = vld [vmem:[#allocation2 + $0x1f4] sm:$0xf]
    %v200 = vld [vmem:[#allocation2 + $0x1f8] sm:$0xf]
    %v201 = vld [vmem:[#allocation2 + $0x1fc] sm:$0xf]
    %v202 = vld [vmem:[%s2] sm:$0x1]
    %v204 = vperm.slane %v202, 0
    %v334 = vunpack.c.l.b16 %v74
    %v335 = vunpack.c.l.b16 %v75
    %v336 = vunpack.c.l.b16 %v76
    %v337 = vunpack.c.l.b16 %v77
    %v338 = vunpack.c.l.b16 %v78
    %v339 = vunpack.c.l.b16 %v79
    %v340 = vunpack.c.l.b16 %v80
    %v341 = vunpack.c.l.b16 %v81
    %v342 = vunpack.c.l.b16 %v82
    %v343 = vunpack.c.l.b16 %v83
    %v344 = vunpack.c.l.b16 %v84
    %v345 = vunpack.c.l.b16 %v85
    %v346 = vunpack.c.l.b16 %v86
    %v347 = vunpack.c.l.b16 %v87
    %v348 = vunpack.c.l.b16 %v88
    %v349 = vunpack.c.l.b16 %v89
    %v350 = vunpack.c.l.b16 %v90
    %v351 = vunpack.c.l.b16 %v91
    %v352 = vunpack.c.l.b16 %v92
    %v353 = vunpack.c.l.b16 %v93
    %v354 = vunpack.c.l.b16 %v94
    %v355 = vunpack.c.l.b16 %v95
    %v356 = vunpack.c.l.b16 %v96
    %v357 = vunpack.c.l.b16 %v97
    %v358 = vunpack.c.l.b16 %v98
    %v359 = vunpack.c.l.b16 %v99
    %v360 = vunpack.c.l.b16 %v100
    %v361 = vunpack.c.l.b16 %v101
    %v362 = vunpack.c.l.b16 %v102
    %v363 = vunpack.c.l.b16 %v103
    %v364 = vunpack.c.l.b16 %v104
    %v365 = vunpack.c.l.b16 %v105
    %v366 = vunpack.c.l.b16 %v106
    %v367 = vunpack.c.l.b16 %v107
    %v368 = vunpack.c.l.b16 %v108
    %v369 = vunpack.c.l.b16 %v109
    %v370 = vunpack.c.l.b16 %v110
    %v371 = vunpack.c.l.b16 %v111
    %v372 = vunpack.c.l.b16 %v112
    %v373 = vunpack.c.l.b16 %v113
    %v374 = vunpack.c.l.b16 %v114
    %v375 = vunpack.c.l.b16 %v115
    %v376 = vunpack.c.l.b16 %v116
    %v377 = vunpack.c.l.b16 %v117
    %v378 = vunpack.c.l.b16 %v118
    %v379 = vunpack.c.l.b16 %v119
    %v380 = vunpack.c.l.b16 %v120
    %v381 = vunpack.c.l.b16 %v121
    %v382 = vunpack.c.l.b16 %v122
    %v383 = vunpack.c.l.b16 %v123
    %v384 = vunpack.c.l.b16 %v124
    %v385 = vunpack.c.l.b16 %v125
    %v386 = vunpack.c.l.b16 %v126
    %v387 = vunpack.c.l.b16 %v127
    %v388 = vunpack.c.l.b16 %v128
    %v389 = vunpack.c.l.b16 %v129
    %v390 = vunpack.c.l.b16 %v130
    %v391 = vunpack.c.l.b16 %v131
    %v392 = vunpack.c.l.b16 %v132
    %v393 = vunpack.c.l.b16 %v133
    %v394 = vunpack.c.l.b16 %v134
    %v395 = vunpack.c.l.b16 %v135
    %v396 = vunpack.c.l.b16 %v136
    %v397 = vunpack.c.l.b16 %v137
    %v398 = vunpack.c.l.b16 %v138
    %v399 = vunpack.c.l.b16 %v139
    %v400 = vunpack.c.l.b16 %v140
    %v401 = vunpack.c.l.b16 %v141
    %v402 = vunpack.c.l.b16 %v142
    %v403 = vunpack.c.l.b16 %v143
    %v404 = vunpack.c.l.b16 %v144
    %v405 = vunpack.c.l.b16 %v145
    %v406 = vunpack.c.l.b16 %v146
    %v407 = vunpack.c.l.b16 %v147
    %v408 = vunpack.c.l.b16 %v148
    %v409 = vunpack.c.l.b16 %v149
    %v410 = vunpack.c.l.b16 %v150
    %v411 = vunpack.c.l.b16 %v151
    %v412 = vunpack.c.l.b16 %v152
    %v413 = vunpack.c.l.b16 %v153
    %v414 = vunpack.c.l.b16 %v154
    %v415 = vunpack.c.l.b16 %v155
    %v416 = vunpack.c.l.b16 %v156
    %v417 = vunpack.c.l.b16 %v157
    %v418 = vunpack.c.l.b16 %v158
    %v419 = vunpack.c.l.b16 %v159
    %v420 = vunpack.c.l.b16 %v160
    %v421 = vunpack.c.l.b16 %v161
    %v422 = vunpack.c.l.b16 %v162
    %v423 = vunpack.c.l.b16 %v163
    %v424 = vunpack.c.l.b16 %v164
    %v425 = vunpack.c.l.b16 %v165
    %v426 = vunpack.c.l.b16 %v166
    %v427 = vunpack.c.l.b16 %v167
    %v428 = vunpack.c.l.b16 %v168
    %v429 = vunpack.c.l.b16 %v169
    %v430 = vunpack.c.l.b16 %v170
    %v431 = vunpack.c.l.b16 %v171
    %v432 = vunpack.c.l.b16 %v172
    %v433 = vunpack.c.l.b16 %v173
    %v434 = vunpack.c.l.b16 %v174
    %v435 = vunpack.c.l.b16 %v175
    %v436 = vunpack.c.l.b16 %v176
    %v437 = vunpack.c.l.b16 %v177
    %v438 = vunpack.c.l.b16 %v178
    %v439 = vunpack.c.l.b16 %v179
    %v440 = vunpack.c.l.b16 %v180
    %v441 = vunpack.c.l.b16 %v181
    %v442 = vunpack.c.l.b16 %v182
    %v443 = vunpack.c.l.b16 %v183
    %v444 = vunpack.c.l.b16 %v184
    %v445 = vunpack.c.l.b16 %v185
    %v446 = vunpack.c.l.b16 %v186
    %v447 = vunpack.c.l.b16 %v187
    %v448 = vunpack.c.l.b16 %v188
    %v449 = vunpack.c.l.b16 %v189
    %v450 = vunpack.c.l.b16 %v190
    %v451 = vunpack.c.l.b16 %v191
    %v452 = vunpack.c.l.b16 %v192
    %v453 = vunpack.c.l.b16 %v193
    %v454 = vunpack.c.l.b16 %v194
    %v455 = vunpack.c.l.b16 %v195
    %v456 = vunpack.c.l.b16 %v196
    %v457 = vunpack.c.l.b16 %v197
    %v458 = vunpack.c.l.b16 %v198
    %v459 = vunpack.c.l.b16 %v199
    %v460 = vunpack.c.l.b16 %v200
    %v461 = vunpack.c.l.b16 %v201
    %v462 = vpack.c.b16 %v335, %v334
    %v463 = vpack.c.b16 %v337, %v336
    %v464 = vpack.c.b16 %v339, %v338
    %v465 = vpack.c.b16 %v341, %v340
    %v466 = vpack.c.b16 %v343, %v342
    %v467 = vpack.c.b16 %v345, %v344
    %v468 = vpack.c.b16 %v347, %v346
    %v469 = vpack.c.b16 %v349, %v348
    %v470 = vpack.c.b16 %v351, %v350
    %v471 = vpack.c.b16 %v353, %v352
    %v472 = vpack.c.b16 %v355, %v354
    %v473 = vpack.c.b16 %v357, %v356
    %v474 = vpack.c.b16 %v359, %v358
    %v475 = vpack.c.b16 %v361, %v360
    %v476 = vpack.c.b16 %v363, %v362
    %v477 = vpack.c.b16 %v365, %v364
    %v478 = vpack.c.b16 %v367, %v366
    %v479 = vpack.c.b16 %v369, %v368
    %v480 = vpack.c.b16 %v371, %v370
    %v481 = vpack.c.b16 %v373, %v372
    %v482 = vpack.c.b16 %v375, %v374
    %v483 = vpack.c.b16 %v377, %v376
    %v484 = vpack.c.b16 %v379, %v378
    %v485 = vpack.c.b16 %v381, %v380
    %v486 = vpack.c.b16 %v383, %v382
    %v487 = vpack.c.b16 %v385, %v384
    %v488 = vpack.c.b16 %v387, %v386
    %v489 = vpack.c.b16 %v389, %v388
    %v490 = vpack.c.b16 %v391, %v390
    %v491 = vpack.c.b16 %v393, %v392
    %v492 = vpack.c.b16 %v395, %v394
    %v493 = vpack.c.b16 %v397, %v396
    %v494 = vpack.c.b16 %v399, %v398
    %v495 = vpack.c.b16 %v401, %v400
    %v496 = vpack.c.b16 %v403, %v402
    %v497 = vpack.c.b16 %v405, %v404
    %v498 = vpack.c.b16 %v407, %v406
    %v499 = vpack.c.b16 %v409, %v408
    %v500 = vpack.c.b16 %v411, %v410
    %v501 = vpack.c.b16 %v413, %v412
    %v502 = vpack.c.b16 %v415, %v414
    %v503 = vpack.c.b16 %v417, %v416
    %v504 = vpack.c.b16 %v419, %v418
    %v505 = vpack.c.b16 %v421, %v420
    %v506 = vpack.c.b16 %v423, %v422
    %v507 = vpack.c.b16 %v425, %v424
    %v508 = vpack.c.b16 %v427, %v426
    %v509 = vpack.c.b16 %v429, %v428
    %v510 = vpack.c.b16 %v431, %v430
    %v511 = vpack.c.b16 %v433, %v432
    %v512 = vpack.c.b16 %v435, %v434
    %v513 = vpack.c.b16 %v437, %v436
    %v514 = vpack.c.b16 %v439, %v438
    %v515 = vpack.c.b16 %v441, %v440
    %v516 = vpack.c.b16 %v443, %v442
    %v517 = vpack.c.b16 %v445, %v444
    %v518 = vpack.c.b16 %v447, %v446
    %v519 = vpack.c.b16 %v449, %v448
    %v520 = vpack.c.b16 %v451, %v450
    %v521 = vpack.c.b16 %v453, %v452
    %v522 = vpack.c.b16 %v455, %v454
    %v523 = vpack.c.b16 %v457, %v456
    %v524 = vpack.c.b16 %v459, %v458
    %v525 = vpack.c.b16 %v461, %v460
    %590 = vmatpush.bf16.msra.mxu0 %v469
    %591 = vmatpush.bf16.msra.mxu0 %v468
    %592 = vmatpush.bf16.msra.mxu0 %v467
    %593 = vmatpush.bf16.msra.mxu0 %v466
    %594 = vmatpush.bf16.msra.mxu0 %v465
    %595 = vmatpush.bf16.msra.mxu0 %v464
    %596 = vmatpush.bf16.msra.mxu0 %v463
    %597 = vmatpush.bf16.msra.mxu0 %v462
    %598 = vmatmul.bf16.gmra.mxu0 %v66
    %v599 = vpop.f32.mrf.mxu0
    %v600 = vadd.f32 %v204, %v599
    %v601 = vpop.f32.mrf.mxu0
    %602 = vdwg.mxu0
    %603 = vmatpush.bf16.msra.mxu0 %v477
    %604 = vmatpush.bf16.msra.mxu0 %v476
    %605 = vmatpush.bf16.msra.mxu0 %v475
    %606 = vmatpush.bf16.msra.mxu0 %v474
    %607 = vmatpush.bf16.msra.mxu0 %v473
    %608 = vmatpush.bf16.msra.mxu0 %v472
    %609 = vmatpush.bf16.msra.mxu0 %v471
    %610 = vmatpush.bf16.msra.mxu0 %v470
    %611 = vmatmul.bf16.gmra.mxu0 %v67
    %v612 = vpop.f32.mrf.mxu0
    %v613 = vadd.f32 %v600, %v612
    %v614 = vpop.f32.mrf.mxu0
    %615 = vdwg.mxu0
    %616 = vmatpush.bf16.msra.mxu0 %v485
    %617 = vmatpush.bf16.msra.mxu0 %v484
    %618 = vmatpush.bf16.msra.mxu0 %v483
    %619 = vmatpush.bf16.msra.mxu0 %v482
    %620 = vmatpush.bf16.msra.mxu0 %v481
    %621 = vmatpush.bf16.msra.mxu0 %v480
    %622 = vmatpush.bf16.msra.mxu0 %v479
    %623 = vmatpush.bf16.msra.mxu0 %v478
    %624 = vmatmul.bf16.gmra.mxu0 %v68
    %v625 = vpop.f32.mrf.mxu0
    %v626 = vadd.f32 %v613, %v625
    %v627 = vpop.f32.mrf.mxu0
    %628 = vdwg.mxu0
    %629 = vmatpush.bf16.msra.mxu0 %v493
    %630 = vmatpush.bf16.msra.mxu0 %v492
    %631 = vmatpush.bf16.msra.mxu0 %v491
    %632 = vmatpush.bf16.msra.mxu0 %v490
    %633 = vmatpush.bf16.msra.mxu0 %v489
    %634 = vmatpush.bf16.msra.mxu0 %v488
    %635 = vmatpush.bf16.msra.mxu0 %v487
    %636 = vmatpush.bf16.msra.mxu0 %v486
    %637 = vmatmul.bf16.gmra.mxu0 %v69
    %v638 = vpop.f32.mrf.mxu0
    %v639 = vadd.f32 %v626, %v638
    %v640 = vpop.f32.mrf.mxu0
    %641 = vdwg.mxu0
    %642 = vmatpush.bf16.msra.mxu0 %v501
    %643 = vmatpush.bf16.msra.mxu0 %v500
    %644 = vmatpush.bf16.msra.mxu0 %v499
    %645 = vmatpush.bf16.msra.mxu0 %v498
    %646 = vmatpush.bf16.msra.mxu0 %v497
    %647 = vmatpush.bf16.msra.mxu0 %v496
    %648 = vmatpush.bf16.msra.mxu0 %v495
    %649 = vmatpush.bf16.msra.mxu0 %v494
    %650 = vmatmul.bf16.gmra.mxu0 %v70
    %v651 = vpop.f32.mrf.mxu0
    %v652 = vadd.f32 %v639, %v651
    %v653 = vpop.f32.mrf.mxu0
    %654 = vdwg.mxu0
    %655 = vmatpush.bf16.msra.mxu0 %v509
    %656 = vmatpush.bf16.msra.mxu0 %v508
    %657 = vmatpush.bf16.msra.mxu0 %v507
    %658 = vmatpush.bf16.msra.mxu0 %v506
    %659 = vmatpush.bf16.msra.mxu0 %v505
    %660 = vmatpush.bf16.msra.mxu0 %v504
    %661 = vmatpush.bf16.msra.mxu0 %v503
    %662 = vmatpush.bf16.msra.mxu0 %v502
    %663 = vmatmul.bf16.gmra.mxu0 %v71
    %v664 = vpop.f32.mrf.mxu0
    %v665 = vadd.f32 %v652, %v664
    %v666 = vpop.f32.mrf.mxu0
    %667 = vdwg.mxu0
    %668 = vmatpush.bf16.msra.mxu0 %v517
    %669 = vmatpush.bf16.msra.mxu0 %v516
    %670 = vmatpush.bf16.msra.mxu0 %v515
    %671 = vmatpush.bf16.msra.mxu0 %v514
    %672 = vmatpush.bf16.msra.mxu0 %v513
    %673 = vmatpush.bf16.msra.mxu0 %v512
    %674 = vmatpush.bf16.msra.mxu0 %v511
    %675 = vmatpush.bf16.msra.mxu0 %v510
    %676 = vmatmul.bf16.gmra.mxu0 %v72
    %v677 = vpop.f32.mrf.mxu0
    %v678 = vadd.f32 %v665, %v677
    %v679 = vpop.f32.mrf.mxu0
    %680 = vdwg.mxu0
    %681 = vmatpush.bf16.msra.mxu0 %v525
    %682 = vmatpush.bf16.msra.mxu0 %v524
    %683 = vmatpush.bf16.msra.mxu0 %v523
    %684 = vmatpush.bf16.msra.mxu0 %v522
    %685 = vmatpush.bf16.msra.mxu0 %v521
    %686 = vmatpush.bf16.msra.mxu0 %v520
    %687 = vmatpush.bf16.msra.mxu0 %v519
    %688 = vmatpush.bf16.msra.mxu0 %v518
    %689 = vmatmul.bf16.gmra.mxu0 %v73
    %v690 = vpop.f32.mrf.mxu0
    %v691 = vadd.f32 %v678, %v690
    %v692 = vpop.f32.mrf.mxu0
    %693 = vdwg.mxu0
    %vm694 = vcmp.gt.f32.partialorder %v691, 0.0
    %v695 = vmul.f32 %v691, 0.2
    %v696 = vsel %vm694, %v691, %v695
    %v697 = vpack.c.bf16 %v696, %v696
    %v698 = vld [vmem:[%s3] sm:$0xf]
    %v699 = vld [vmem:[%s3 + $0x4] sm:$0xf]
    %v700 = vld [vmem:[%s3 + $0x8] sm:$0xf]
    %v701 = vld [vmem:[%s3 + $0xc] sm:$0xf]
    %v702 = vld [vmem:[%s3 + $0x10] sm:$0xf]
    %v703 = vld [vmem:[%s3 + $0x14] sm:$0xf]
    %v704 = vld [vmem:[%s3 + $0x18] sm:$0xf]
    %v705 = vld [vmem:[%s3 + $0x1c] sm:$0xf]
    %v706 = vld [vmem:[%s3 + $0x20] sm:$0xf]
    %v707 = vld [vmem:[%s3 + $0x24] sm:$0xf]
    %v708 = vld [vmem:[%s3 + $0x28] sm:$0xf]
    %v709 = vld [vmem:[%s3 + $0x2c] sm:$0xf]
    %v710 = vld [vmem:[%s3 + $0x30] sm:$0xf]
    %v711 = vld [vmem:[%s3 + $0x34] sm:$0xf]
    %v712 = vld [vmem:[%s3 + $0x38] sm:$0xf]
    %v713 = vld [vmem:[%s3 + $0x3c] sm:$0xf]
    %v714 = vld [vmem:[%s4] sm:$0x1]
    %v716 = vperm.slane %v714, 0
    %v734 = vunpack.c.l.b16 %v698
    %v735 = vunpack.c.l.b16 %v699
    %v736 = vunpack.c.l.b16 %v700
    %v737 = vunpack.c.l.b16 %v701
    %v738 = vunpack.c.l.b16 %v702
    %v739 = vunpack.c.l.b16 %v703
    %v740 = vunpack.c.l.b16 %v704
    %v741 = vunpack.c.l.b16 %v705
    %v742 = vunpack.c.l.b16 %v706
    %v743 = vunpack.c.l.b16 %v707
    %v744 = vunpack.c.l.b16 %v708
    %v745 = vunpack.c.l.b16 %v709
    %v746 = vunpack.c.l.b16 %v710
    %v747 = vunpack.c.l.b16 %v711
    %v748 = vunpack.c.l.b16 %v712
    %v749 = vunpack.c.l.b16 %v713
    %v750 = vpack.c.b16 %v735, %v734
    %v751 = vpack.c.b16 %v737, %v736
    %v752 = vpack.c.b16 %v739, %v738
    %v753 = vpack.c.b16 %v741, %v740
    %v754 = vpack.c.b16 %v743, %v742
    %v755 = vpack.c.b16 %v745, %v744
    %v756 = vpack.c.b16 %v747, %v746
    %v757 = vpack.c.b16 %v749, %v748
    %766 = vmatpush.bf16.msra.mxu0 %v757
    %767 = vmatpush.bf16.msra.mxu0 %v756
    %768 = vmatpush.bf16.msra.mxu0 %v755
    %769 = vmatpush.bf16.msra.mxu0 %v754
    %770 = vmatpush.bf16.msra.mxu0 %v753
    %771 = vmatpush.bf16.msra.mxu0 %v752
    %772 = vmatpush.bf16.msra.mxu0 %v751
    %773 = vmatpush.bf16.msra.mxu0 %v750
    %774 = vmatmul.bf16.gmra.mxu0 %v697
    %v775 = vpop.f32.mrf.mxu0
    %v776 = vadd.f32 %v716, %v775
    %v777 = vpop.f32.mrf.mxu0
    %778 = vdwg.mxu0
    %vm779 = vcmp.gt.f32.partialorder %v776, 0.0
    %v780 = vmul.f32 %v776, 0.2
    %v781 = vsel %vm779, %v776, %v780
    %v782 = vpack.c.bf16 %v781, %v781
    %v783 = vld [vmem:[%s5] sm:$0xf]
    %v784 = vld [vmem:[%s5 + $0x4] sm:$0xf]
    %v785 = vld [vmem:[%s5 + $0x8] sm:$0xf]
    %v786 = vld [vmem:[%s5 + $0xc] sm:$0xf]
    %v787 = vld [vmem:[%s5 + $0x10] sm:$0xf]
    %v788 = vld [vmem:[%s5 + $0x14] sm:$0xf]
    %v789 = vld [vmem:[%s5 + $0x18] sm:$0xf]
    %v790 = vld [vmem:[%s5 + $0x1c] sm:$0xf]
    %v791 = vld [vmem:[%s5 + $0x20] sm:$0xf]
    %v792 = vld [vmem:[%s5 + $0x24] sm:$0xf]
    %v793 = vld [vmem:[%s5 + $0x28] sm:$0xf]
    %v794 = vld [vmem:[%s5 + $0x2c] sm:$0xf]
    %v795 = vld [vmem:[%s5 + $0x30] sm:$0xf]
    %v796 = vld [vmem:[%s5 + $0x34] sm:$0xf]
    %v797 = vld [vmem:[%s5 + $0x38] sm:$0xf]
    %v798 = vld [vmem:[%s5 + $0x3c] sm:$0xf]
    %v799 = vld [vmem:[%s6] sm:$0x1]
    %v801 = vperm.slane %v799, 0
    %v819 = vunpack.c.l.b16 %v783
    %v820 = vunpack.c.l.b16 %v784
    %v821 = vunpack.c.l.b16 %v785
    %v822 = vunpack.c.l.b16 %v786
    %v823 = vunpack.c.l.b16 %v787
    %v824 = vunpack.c.l.b16 %v788
    %v825 = vunpack.c.l.b16 %v789
    %v826 = vunpack.c.l.b16 %v790
    %v827 = vunpack.c.l.b16 %v791
    %v828 = vunpack.c.l.b16 %v792
    %v829 = vunpack.c.l.b16 %v793
    %v830 = vunpack.c.l.b16 %v794
    %v831 = vunpack.c.l.b16 %v795
    %v832 = vunpack.c.l.b16 %v796
    %v833 = vunpack.c.l.b16 %v797
    %v834 = vunpack.c.l.b16 %v798
    %v835 = vpack.c.b16 %v820, %v819
    %v836 = vpack.c.b16 %v822, %v821
    %v837 = vpack.c.b16 %v824, %v823
    %v838 = vpack.c.b16 %v826, %v825
    %v839 = vpack.c.b16 %v828, %v827
    %v840 = vpack.c.b16 %v830, %v829
    %v841 = vpack.c.b16 %v832, %v831
    %v842 = vpack.c.b16 %v834, %v833
    %851 = vmatpush.bf16.msra.mxu0 %v842
    %852 = vmatpush.bf16.msra.mxu0 %v841
    %853 = vmatpush.bf16.msra.mxu0 %v840
    %854 = vmatpush.bf16.msra.mxu0 %v839
    %855 = vmatpush.bf16.msra.mxu0 %v838
    %856 = vmatpush.bf16.msra.mxu0 %v837
    %857 = vmatpush.bf16.msra.mxu0 %v836
    %858 = vmatpush.bf16.msra.mxu0 %v835
    %859 = vmatmul.bf16.gmra.mxu0 %v782
    %v860 = vpop.f32.mrf.mxu0
    %v861 = vadd.f32 %v801, %v860
    %v862 = vpop.f32.mrf.mxu0
    %863 = vdwg.mxu0
    %864 = vst [vmem:[#allocation5] sm:$0x3] %v861
    // Predicated region
    $region34: #{doodle_mlp_forward.1} parent=1 // pred_check
      _
    $region35: #{doodle_mlp_forward.1} parent=1 // pred_check_branch
      %866 = sbr.rel (0) target = $region37
    $region36: #{doodle_mlp_forward.1} parent=1 // pred_region
      %868 = vsyncadd [#allocation4], 0
      %s870 = sshll.u32 [#allocation5], 4
      %s871 = int_to_ptr.vmem [resolvable:$true] %s870
      %s872 = sshll.u32 %s7, 4
      %s873 = int_to_ptr.hbm [resolvable:$true] %s872
      %875 = dma.vmem_to_hbm [thread:$0]  %s871, 32, %s873, [#allocation4]
    $region37: #{doodle_mlp_forward.1} parent=1 // pred_fallthru
      _
    // Predicated region
    $region38: #{doodle_mlp_forward.1} parent=1 // pred_check
      _
    $region39: #{doodle_mlp_forward.1} parent=1 // pred_check_branch
      %877 = sbr.rel (0) target = $region41
    $region40: #{doodle_mlp_forward.1} parent=1 // pred_region
      %879 = dma.done [#allocation4], 32
    $region41: #{doodle_mlp_forward.1} parent=1 // pred_fallthru
      _
    %880 = vsyncpa [#allocation3], 1
    %881 = vsyncpa [#allocation4], 1

</llo_original>
